<compile_context>
chip_gen: v5e
topology: v5e:2x2
jax: 0.10.0
libtpu: 0.0.40
codegen_flags: <defaults>
</compile_context>

<pallas_src>
import functools

import numpy as np
import jax
import jax.numpy as jnp
from jax.experimental import pallas as pl
from jax.experimental.pallas import tpu as pltpu


def _round_up(x, m):
    return (x + m - 1) // m * m


def _vmem_cap_bytes():
    """Physical per-core VMEM, with a conservative (v7x) fallback."""
    try:
        info = pltpu.get_tpu_info()
        cap = getattr(info, "vmem_capacity_bytes", None)
        if cap:
            return int(cap)
    except Exception:
        pass
    return 64 << 20  # v7x per-TC VMEM; safe lower bound for v5e/v6e too


def gnet_kernel(x_ref, w1_ref, b1_ref, w2_ref, b2_ref, w3_ref, b3_ref, o_ref):
    cdt = w1_ref.dtype  # bf16 (or f32) MXU input dtype; x_ref already cast

    # Linear 1 + ReLU  (f32 accumulate, bias/ReLU in f32 on the VPU)
    h = jnp.dot(x_ref[...], w1_ref[...], preferred_element_type=jnp.float32)
    h = jnp.maximum(h + b1_ref[...], 0.0)

    # Linear 2 + ReLU
    h = jnp.dot(h.astype(cdt), w2_ref[...], preferred_element_type=jnp.float32)
    h = jnp.maximum(h + b2_ref[...], 0.0)

    # Linear 3 + final ReLU (GNet.forward applies torch.relu to the output)
    h = jnp.dot(h.astype(cdt), w3_ref[...], preferred_element_type=jnp.float32)
    h = jnp.maximum(h + b3_ref[...], 0.0)

    o_ref[...] = h.astype(o_ref.dtype)


@functools.partial(jax.jit, static_argnames=("block_rows", "weight_dtype"))
def gnet_forward(x, params, block_rows=None, weight_dtype=jnp.bfloat16):
    """x: (N, F_in) float32. params: transposed (in, out) weights, (1, out) biases."""
    w1, b1 = params["w1"], params["b1"]   # (F_in, F_in), (1, F_in)
    w2, b2 = params["w2"], params["b2"]   # (F_in, F_in), (1, F_in)
    w3, b3 = params["w3"], params["b3"]   # (F_in, F_out), (1, F_out)

    n, f_in = x.shape
    f_out = w3.shape[1]

    xbytes = np.dtype(weight_dtype).itemsize
    # Native sublane packing: 8 rows for 32-bit, 16 for bf16.
    row_mult = 8 * max(1, 4 // xbytes)

    # --- Row tiling ------------------------------------------------------
    # Pad the batch only to the sublane multiple; pick the row tile so the
    # grid has ~2 steps (both v7x TCs get work; single extra step is noise on
    # single-TC v5e/v6e) with at most one slightly ragged (padded) tile.
    n_r = _round_up(max(n, 1), row_mult)
    if block_rows is None:
        target_steps = 2 if n_r >= 2 * row_mult else 1
        bm = min(2048, _round_up(pl.cdiv(n_r, target_steps), row_mult))
    else:
        bm = max(row_mult, min(_round_up(block_rows, row_mult), n_r))
    n_p = _round_up(n_r, bm)
    grid = (n_p // bm,)

    # --- Operand prep (no feature-lane padding) --------------------------
    # Cast x to the MXU input dtype in the wrapper so the dominant DMA stream
    # is already half-width; the kernel would cast anyway (numerically equal).
    x_p = jnp.pad(x, ((0, n_p - n), (0, 0))).astype(weight_dtype)
    w1_c = w1.astype(weight_dtype)
    w2_c = w2.astype(weight_dtype)
    w3_c = w3.astype(weight_dtype)
    # biases stay f32 (added to the f32 accumulator on the VPU)

    # --- VMEM budget ------------------------------------------------------
    weight_bytes = (2 * f_in * f_in + f_in * f_out) * xbytes
    bias_bytes = (2 * f_in + f_out) * 4
    vmem_bytes = (2 * bm * f_in * xbytes          # double-buffered x tiles
                  + 2 * bm * f_out * 4            # double-buffered out tiles
                  + 2 * (weight_bytes + bias_bytes)
                  + (4 << 20))                    # headroom
    vmem_cap = _vmem_cap_bytes()
    vmem_limit = int(min(max(vmem_bytes, 16 << 20), vmem_cap - (16 << 20)))

    # TODO(synk): for very large f_in (weights > ~40 MiB), add an "arbitrary"
    # K grid axis that tiles layer 1 over f_in (accumulate into a VMEM scratch,
    # run layers 2/3 under pl.when(k == last)) and single-buffer the resident
    # weights via pipeline_mode=pl.Buffered(1); unnecessary at these sizes.

    cost = pl.CostEstimate(
        flops=2 * n_p * (2 * f_in * f_in + f_in * f_out),
        transcendentals=0,
        bytes_accessed=(n_p * f_in * xbytes + weight_bytes + bias_bytes
                        + n_p * f_out * 4),
    )

    out_p = pl.pallas_call(
        gnet_kernel,
        out_shape=jax.ShapeDtypeStruct((n_p, f_out), jnp.float32),
        grid_spec=pltpu.PrefetchScalarGridSpec(
            num_scalar_prefetch=0,
            grid=grid,
            in_specs=[
                # x: tile over rows; last dim = full array dim (no 128 pad).
                pl.BlockSpec((bm, f_in), lambda i: (i, 0)),
                # weights / biases: full-array blocks with constant index_map
                # -> kept VMEM-resident across the whole grid.
                pl.BlockSpec((f_in, f_in), lambda i: (0, 0)),
                pl.BlockSpec((1, f_in), lambda i: (0, 0)),
                pl.BlockSpec((f_in, f_in), lambda i: (0, 0)),
                pl.BlockSpec((1, f_in), lambda i: (0, 0)),
                pl.BlockSpec((f_in, f_out), lambda i: (0, 0)),
                pl.BlockSpec((1, f_out), lambda i: (0, 0)),
            ],
            # Unpadded (bm, f_out) store: 8x fewer output bytes beats the
            # lane-dense-store preference for this HBM-bound kernel.
            out_specs=pl.BlockSpec((bm, f_out), lambda i: (i, 0)),
        ),
        compiler_params=pltpu.CompilerParams(
            # TODO(synk): on v7x verify "parallel" core-shards the row axis
            # across both TensorCores; switch to CORE_PARALLEL if it does not.
            dimension_semantics=("parallel",),
            vmem_limit_bytes=vmem_limit,
        ),
        cost_estimate=cost,
    )(x_p, w1_c, b1, w2_c, b2, w3_c, b3)

    # Only a row slice (if the batch needed sublane padding); no feature slice.
    return out_p if n_p == n else out_p[:n]


def init_gnet_params(key, input_features, output_features):
    """Mimics nn.Linear's uniform(-1/sqrt(in), 1/sqrt(in)) init.

    Weights stored transposed, shape (in, out), so the kernel does x @ W.
    """
    ks = jax.random.split(key, 6)
    dims = [
        (input_features, input_features),
        (input_features, input_features),
        (input_features, output_features),
    ]
    params = {}
    for li, (fin, fout) in enumerate(dims, start=1):
        bound = 1.0 / (fin ** 0.5)
        params[f"w{li}"] = jax.random.uniform(
            ks[2 * (li - 1)], (fin, fout), jnp.float32, minval=-bound, maxval=bound)
        params[f"b{li}"] = jax.random.uniform(
            ks[2 * (li - 1) + 1], (1, fout), jnp.float32, minval=-bound, maxval=bound)
    return params


def gnet_reference(x, params, weight_dtype=jnp.float32):
    def layer(h, w, b):
        y = jnp.dot(h.astype(weight_dtype), w.astype(weight_dtype),
                    preferred_element_type=jnp.float32) + b
        return jnp.maximum(y, 0.0)
    h = layer(x, params["w1"], params["b1"])
    h = layer(h, params["w2"], params["b2"])
    h = layer(h, params["w3"], params["b3"])
    return h


if __name__ == "__main__":
    input_features = 32
    output_features = 16
    batch = 256  # auto tile -> bm=128, grid=(2,): both v7x TCs get a step

    key = jax.random.PRNGKey(0)
    k_x, k_p = jax.random.split(key)

    x = jax.random.normal(k_x, (batch, input_features), dtype=jnp.float32)
    params = init_gnet_params(k_p, input_features, output_features)

    out = gnet_forward(x, params)
    out = jax.block_until_ready(out)
    assert out.shape == (batch, output_features)

    # Tight check vs a reference mirroring the kernel's bf16 weight/activation cast.
    ref_bf16 = gnet_reference(x, params, weight_dtype=jnp.bfloat16)
    assert jnp.allclose(out, ref_bf16, atol=2e-3, rtol=2e-3)

    # Loose check vs the pure-f32 PyTorch-equivalent forward.
    ref_f32 = gnet_reference(x, params, weight_dtype=jnp.float32)
    assert jnp.allclose(out, ref_f32, atol=5e-2, rtol=5e-2)

    print("KERNEL_OK")
</pallas_src>

<mosaic_0001>
module attributes {stable_mosaic.version = 11 : i64} {
  func.func @gnet_kernel(%arg0: i32, %arg1: memref<128x32xbf16, #tpu.memory_space<vmem>>, %arg2: memref<32x32xbf16, #tpu.memory_space<vmem>>, %arg3: memref<1x32xf32, #tpu.memory_space<vmem>>, %arg4: memref<32x32xbf16, #tpu.memory_space<vmem>>, %arg5: memref<1x32xf32, #tpu.memory_space<vmem>>, %arg6: memref<32x16xbf16, #tpu.memory_space<vmem>>, %arg7: memref<1x16xf32, #tpu.memory_space<vmem>>, %arg8: memref<128x16xf32, #tpu.memory_space<vmem>>) attributes {dimension_semantics = [#tpu.dimension_semantics<parallel>], iteration_bounds = array<i64: 2>, scalar_prefetch = 0 : i64, scratch_operands = 0 : i64, tpu.core_type = #tpu.core_type<tc>, window_params = [{transform_indices = @transform_0, window_bounds = array<i64: 128, 32>}, {pipeline_mode = #tpu.pipeline_mode<synchronous>, transform_indices = @transform_1, window_bounds = array<i64: 32, 32>}, {pipeline_mode = #tpu.pipeline_mode<synchronous>, transform_indices = @transform_2, window_bounds = array<i64: 1, 32>}, {pipeline_mode = #tpu.pipeline_mode<synchronous>, transform_indices = @transform_3, window_bounds = array<i64: 32, 32>}, {pipeline_mode = #tpu.pipeline_mode<synchronous>, transform_indices = @transform_4, window_bounds = array<i64: 1, 32>}, {pipeline_mode = #tpu.pipeline_mode<synchronous>, transform_indices = @transform_5, window_bounds = array<i64: 32, 16>}, {pipeline_mode = #tpu.pipeline_mode<synchronous>, transform_indices = @transform_6, window_bounds = array<i64: 1, 16>}, {transform_indices = @transform_7, window_bounds = array<i64: 128, 16>}]} {
    %c0 = arith.constant 0 : index
    %c0_0 = arith.constant 0 : index
    %0 = vector.load %arg1[%c0, %c0_0] : memref<128x32xbf16, #tpu.memory_space<vmem>>, vector<128x32xbf16>
    %c0_1 = arith.constant 0 : index
    %c0_2 = arith.constant 0 : index
    %1 = vector.load %arg2[%c0_1, %c0_2] : memref<32x32xbf16, #tpu.memory_space<vmem>>, vector<32x32xbf16>
    %cst = arith.constant dense<0.000000e+00> : vector<128x32xf32>
    %2 = tpu.matmul %0, %1, %cst {dimension_numbers = #tpu.dot_dimension_numbers<[1], [0], [0], [1], [0, 0, 1, 1], [], []>} : vector<128x32xbf16>, vector<32x32xbf16>, vector<128x32xf32> -> vector<128x32xf32>
    %c0_3 = arith.constant 0 : index
    %c0_4 = arith.constant 0 : index
    %3 = vector.load %arg3[%c0_3, %c0_4] : memref<1x32xf32, #tpu.memory_space<vmem>>, vector<1x32xf32>
    %4 = vector.broadcast %3 : vector<1x32xf32> to vector<128x32xf32>
    %5 = arith.addf %2, %4 : vector<128x32xf32>
    %cst_5 = arith.constant 0.000000e+00 : f32
    %6 = vector.broadcast %cst_5 : f32 to vector<128x32xf32>
    %7 = arith.maximumf %5, %6 : vector<128x32xf32>
    %8 = arith.truncf %7 : vector<128x32xf32> to vector<128x32xbf16>
    %c0_6 = arith.constant 0 : index
    %c0_7 = arith.constant 0 : index
    %9 = vector.load %arg4[%c0_6, %c0_7] : memref<32x32xbf16, #tpu.memory_space<vmem>>, vector<32x32xbf16>
    %cst_8 = arith.constant dense<0.000000e+00> : vector<128x32xf32>
    %10 = tpu.matmul %8, %9, %cst_8 {dimension_numbers = #tpu.dot_dimension_numbers<[1], [0], [0], [1], [0, 0, 1, 1], [], []>} : vector<128x32xbf16>, vector<32x32xbf16>, vector<128x32xf32> -> vector<128x32xf32>
    %c0_9 = arith.constant 0 : index
    %c0_10 = arith.constant 0 : index
    %11 = vector.load %arg5[%c0_9, %c0_10] : memref<1x32xf32, #tpu.memory_space<vmem>>, vector<1x32xf32>
    %12 = vector.broadcast %11 : vector<1x32xf32> to vector<128x32xf32>
    %13 = arith.addf %10, %12 : vector<128x32xf32>
    %cst_11 = arith.constant 0.000000e+00 : f32
    %14 = vector.broadcast %cst_11 : f32 to vector<128x32xf32>
    %15 = arith.maximumf %13, %14 : vector<128x32xf32>
    %16 = arith.truncf %15 : vector<128x32xf32> to vector<128x32xbf16>
    %c0_12 = arith.constant 0 : index
    %c0_13 = arith.constant 0 : index
    %17 = vector.load %arg6[%c0_12, %c0_13] : memref<32x16xbf16, #tpu.memory_space<vmem>>, vector<32x16xbf16>
    %cst_14 = arith.constant dense<0.000000e+00> : vector<128x16xf32>
    %18 = tpu.matmul %16, %17, %cst_14 {dimension_numbers = #tpu.dot_dimension_numbers<[1], [0], [0], [1], [0, 0, 1, 1], [], []>} : vector<128x32xbf16>, vector<32x16xbf16>, vector<128x16xf32> -> vector<128x16xf32>
    %c0_15 = arith.constant 0 : index
    %c0_16 = arith.constant 0 : index
    %19 = vector.load %arg7[%c0_15, %c0_16] : memref<1x16xf32, #tpu.memory_space<vmem>>, vector<1x16xf32>
    %20 = vector.broadcast %19 : vector<1x16xf32> to vector<128x16xf32>
    %21 = arith.addf %18, %20 : vector<128x16xf32>
    %cst_17 = arith.constant 0.000000e+00 : f32
    %22 = vector.broadcast %cst_17 : f32 to vector<128x16xf32>
    %23 = arith.maximumf %21, %22 : vector<128x16xf32>
    %c0_18 = arith.constant 0 : index
    %c0_19 = arith.constant 0 : index
    %24 = vector.load %arg8[%c0_18, %c0_19] : memref<128x16xf32, #tpu.memory_space<vmem>>, vector<128x16xf32>
    tpu.vector_store %arg8[%c0_18, %c0_19], %23 {strides = array<i32>} : memref<128x16xf32, #tpu.memory_space<vmem>>, vector<128x16xf32>,
    return
  }
  func.func @transform_0(%arg0: i32) -> (i32, i32) {
    %c0_i32 = arith.constant 0 : i32
    %c0_i32_0 = arith.constant 0 : i32
    return %arg0, %c0_i32 : i32, i32
  }
  func.func @transform_1(%arg0: i32) -> (i32, i32) {
    %c0_i32 = arith.constant 0 : i32
    %c0_i32_0 = arith.constant 0 : i32
    %c0_i32_1 = arith.constant 0 : i32
    return %c0_i32, %c0_i32_0 : i32, i32
  }
  func.func @transform_2(%arg0: i32) -> (i32, i32) {
    %c0_i32 = arith.constant 0 : i32
    %c0_i32_0 = arith.constant 0 : i32
    %c0_i32_1 = arith.constant 0 : i32
    return %c0_i32, %c0_i32_0 : i32, i32
  }
  func.func @transform_3(%arg0: i32) -> (i32, i32) {
    %c0_i32 = arith.constant 0 : i32
    %c0_i32_0 = arith.constant 0 : i32
    %c0_i32_1 = arith.constant 0 : i32
    return %c0_i32, %c0_i32_0 : i32, i32
  }
  func.func @transform_4(%arg0: i32) -> (i32, i32) {
    %c0_i32 = arith.constant 0 : i32
    %c0_i32_0 = arith.constant 0 : i32
    %c0_i32_1 = arith.constant 0 : i32
    return %c0_i32, %c0_i32_0 : i32, i32
  }
  func.func @transform_5(%arg0: i32) -> (i32, i32) {
    %c0_i32 = arith.constant 0 : i32
    %c0_i32_0 = arith.constant 0 : i32
    %c0_i32_1 = arith.constant 0 : i32
    return %c0_i32, %c0_i32_0 : i32, i32
  }
  func.func @transform_6(%arg0: i32) -> (i32, i32) {
    %c0_i32 = arith.constant 0 : i32
    %c0_i32_0 = arith.constant 0 : i32
    %c0_i32_1 = arith.constant 0 : i32
    return %c0_i32, %c0_i32_0 : i32, i32
  }
  func.func @transform_7(%arg0: i32) -> (i32, i32) {
    %c0_i32 = arith.constant 0 : i32
    %c0_i32_0 = arith.constant 0 : i32
    return %arg0, %c0_i32 : i32, i32
  }
}

</mosaic_0001>

<llo_original>
// kernel: gnet_forward.1
$region0: #{gnet_forward.1}
  #allocation0 [shape = 'u32[]', space=smem, size = 0x4, offset = 0x4, fixed_abs, tag = 'smem constant byte address 0x4 - core index']
  #allocation1 [shape = 'u32[72,128]{1,0:T(1,128)}', space=vmem, size = 0x9000, scoped, tag = 'internal scratch']
  %s0 = inlined_call_operand.vmem [shape: bf16[256,32], index: 0, kind: input, shape index: {}]
  %s1 = inlined_call_operand.vmem [shape: bf16[32,32], index: 1, kind: input, shape index: {}]
  %s2 = inlined_call_operand.vmem [shape: f32[1,32], index: 2, kind: input, shape index: {}]
  %s3 = inlined_call_operand.vmem [shape: bf16[32,32], index: 3, kind: input, shape index: {}]
  %s4 = inlined_call_operand.vmem [shape: f32[1,32], index: 4, kind: input, shape index: {}]
  %s5 = inlined_call_operand.vmem [shape: bf16[32,16], index: 5, kind: input, shape index: {}]
  %s6 = inlined_call_operand.vmem [shape: f32[1,16], index: 6, kind: input, shape index: {}]
  %s7 = inlined_call_operand.vmem [shape: f32[256,16], index: 7, kind: output, shape index: {}]
  %s8 = sld [smem:[#allocation0]]
  $region61: #{gnet_forward.1} parent=0
    _
  %s10 = ssub.s32 1, %s8
  %s11 = scalar_select 0, %s10, %s8
  loop: start=0, step=1, limit=4
  $region2: #{gnet_forward.1} parent=0 // loop_pre_header
    _
  $region3: #{gnet_forward.1} parent=0 // loop_header
    %s13 = sphi 0, %s17
    %p14 = scmp.ge.s32.totalorder %s13, 4
    %s23 = sphi 0, %s25
    %s26 = sphi 0, %s23
    %s27 = sphi 0, %s26
    %s43 = sphi 0, %s27
    %s47 = sphi 0, %s47
    %s49 = sphi 0, %s47
    %s50 = sphi 0, %s49
    %s64 = sphi 0, %s50
    %s68 = sphi 0, %s68
    %s70 = sphi 0, %s68
    %s71 = sphi 0, %s70
    %s85 = sphi 0, %s71
    %s89 = sphi 0, %s89
    %s91 = sphi 0, %s89
    %s92 = sphi 0, %s91
    %s106 = sphi 0, %s92
    %s110 = sphi 0, %s110
    %s112 = sphi 0, %s110
    %s113 = sphi 0, %s112
    %s127 = sphi 0, %s113
    %s131 = sphi 0, %s131
    %s133 = sphi 0, %s131
    %s134 = sphi 0, %s133
    %s148 = sphi 0, %s134
    %s152 = sphi 0, %s152
    %s154 = sphi 0, %s152
    %s155 = sphi 0, %s154
    %s169 = sphi 0, %s155
    %s175 = sphi 0, %s177
    %s178 = sphi 0, %s175
    %s179 = sphi 0, %s178
    %s195 = sphi 0, %s179
  $region4: #{gnet_forward.1} parent=0 // loop_header_branch
    %16 = sbr.rel (%p14) target = $region8
  $region5: #{gnet_forward.1} parent=0 // loop_body
    %s18 = ssub.s32 %s13, 1
    %s19 = ssub.s32 %s13, 2
    %s20 = sadd.s32 %s13, 1
    %s21 = ssub.s32 %s13, %s20
    %p22 = scmp.eq.s32.totalorder %s21, 0
    %s24 = sadd.s32 %s23, 1
    %s25 = scalar_select %p22, %s23, %s24
    %p28 = pneg %p22
    %p29 = scmp.eq.s32.totalorder %s13, 1
    %p30 = por %p28, %p29
    %p31 = scmp.ne.s32.totalorder %s23, %s26
    %p32 = scmp.eq.s32.totalorder %s13, 0
    %p33 = por %p31, %p32
    %p34 = scmp.ne.s32.totalorder %s23, %s26
    %p35 = scmp.eq.s32.totalorder %s18, 1
    %p36 = por %p34, %p35
    %p37 = scmp.ne.s32.totalorder %s26, %s27
    %p38 = scmp.eq.s32.totalorder %s18, 0
    %p39 = por %p37, %p38
    %p40 = scmp.ne.s32.totalorder %s26, %s27
    %p41 = scmp.eq.s32.totalorder %s19, 1
    %p42 = por %p40, %p41
    %p44 = scmp.ne.s32.totalorder %s27, %s43
    %p45 = scmp.eq.s32.totalorder %s19, 0
    %p46 = por %p44, %p45
    %s48 = sadd.s32 %s47, 1
    %p51 = scmp.eq.s32.totalorder %s13, 1
    %p52 = scmp.ne.s32.totalorder %s47, %s49
    %p53 = scmp.eq.s32.totalorder %s13, 0
    %p54 = por %p52, %p53
    %p55 = scmp.ne.s32.totalorder %s47, %s49
    %p56 = scmp.eq.s32.totalorder %s18, 1
    %p57 = por %p55, %p56
    %p58 = scmp.ne.s32.totalorder %s49, %s50
    %p59 = scmp.eq.s32.totalorder %s18, 0
    %p60 = por %p58, %p59
    %p61 = scmp.ne.s32.totalorder %s49, %s50
    %p62 = scmp.eq.s32.totalorder %s19, 1
    %p63 = por %p61, %p62
    %p65 = scmp.ne.s32.totalorder %s50, %s64
    %p66 = scmp.eq.s32.totalorder %s19, 0
    %p67 = por %p65, %p66
    %s69 = sadd.s32 %s68, 1
    %p72 = scmp.eq.s32.totalorder %s13, 1
    %p73 = scmp.ne.s32.totalorder %s68, %s70
    %p74 = scmp.eq.s32.totalorder %s13, 0
    %p75 = por %p73, %p74
    %p76 = scmp.ne.s32.totalorder %s68, %s70
    %p77 = scmp.eq.s32.totalorder %s18, 1
    %p78 = por %p76, %p77
    %p79 = scmp.ne.s32.totalorder %s70, %s71
    %p80 = scmp.eq.s32.totalorder %s18, 0
    %p81 = por %p79, %p80
    %p82 = scmp.ne.s32.totalorder %s70, %s71
    %p83 = scmp.eq.s32.totalorder %s19, 1
    %p84 = por %p82, %p83
    %p86 = scmp.ne.s32.totalorder %s71, %s85
    %p87 = scmp.eq.s32.totalorder %s19, 0
    %p88 = por %p86, %p87
    %s90 = sadd.s32 %s89, 1
    %p93 = scmp.eq.s32.totalorder %s13, 1
    %p94 = scmp.ne.s32.totalorder %s89, %s91
    %p95 = scmp.eq.s32.totalorder %s13, 0
    %p96 = por %p94, %p95
    %p97 = scmp.ne.s32.totalorder %s89, %s91
    %p98 = scmp.eq.s32.totalorder %s18, 1
    %p99 = por %p97, %p98
    %p100 = scmp.ne.s32.totalorder %s91, %s92
    %p101 = scmp.eq.s32.totalorder %s18, 0
    %p102 = por %p100, %p101
    %p103 = scmp.ne.s32.totalorder %s91, %s92
    %p104 = scmp.eq.s32.totalorder %s19, 1
    %p105 = por %p103, %p104
    %p107 = scmp.ne.s32.totalorder %s92, %s106
    %p108 = scmp.eq.s32.totalorder %s19, 0
    %p109 = por %p107, %p108
    %s111 = sadd.s32 %s110, 1
    %p114 = scmp.eq.s32.totalorder %s13, 1
    %p115 = scmp.ne.s32.totalorder %s110, %s112
    %p116 = scmp.eq.s32.totalorder %s13, 0
    %p117 = por %p115, %p116
    %p118 = scmp.ne.s32.totalorder %s110, %s112
    %p119 = scmp.eq.s32.totalorder %s18, 1
    %p120 = por %p118, %p119
    %p121 = scmp.ne.s32.totalorder %s112, %s113
    %p122 = scmp.eq.s32.totalorder %s18, 0
    %p123 = por %p121, %p122
    %p124 = scmp.ne.s32.totalorder %s112, %s113
    %p125 = scmp.eq.s32.totalorder %s19, 1
    %p126 = por %p124, %p125
    %p128 = scmp.ne.s32.totalorder %s113, %s127
    %p129 = scmp.eq.s32.totalorder %s19, 0
    %p130 = por %p128, %p129
    %s132 = sadd.s32 %s131, 1
    %p135 = scmp.eq.s32.totalorder %s13, 1
    %p136 = scmp.ne.s32.totalorder %s131, %s133
    %p137 = scmp.eq.s32.totalorder %s13, 0
    %p138 = por %p136, %p137
    %p139 = scmp.ne.s32.totalorder %s131, %s133
    %p140 = scmp.eq.s32.totalorder %s18, 1
    %p141 = por %p139, %p140
    %p142 = scmp.ne.s32.totalorder %s133, %s134
    %p143 = scmp.eq.s32.totalorder %s18, 0
    %p144 = por %p142, %p143
    %p145 = scmp.ne.s32.totalorder %s133, %s134
    %p146 = scmp.eq.s32.totalorder %s19, 1
    %p147 = por %p145, %p146
    %p149 = scmp.ne.s32.totalorder %s134, %s148
    %p150 = scmp.eq.s32.totalorder %s19, 0
    %p151 = por %p149, %p150
    %s153 = sadd.s32 %s152, 1
    %p156 = scmp.eq.s32.totalorder %s13, 1
    %p157 = scmp.ne.s32.totalorder %s152, %s154
    %p158 = scmp.eq.s32.totalorder %s13, 0
    %p159 = por %p157, %p158
    %p160 = scmp.ne.s32.totalorder %s152, %s154
    %p161 = scmp.eq.s32.totalorder %s18, 1
    %p162 = por %p160, %p161
    %p163 = scmp.ne.s32.totalorder %s154, %s155
    %p164 = scmp.eq.s32.totalorder %s18, 0
    %p165 = por %p163, %p164
    %p166 = scmp.ne.s32.totalorder %s154, %s155
    %p167 = scmp.eq.s32.totalorder %s19, 1
    %p168 = por %p166, %p167
    %p170 = scmp.ne.s32.totalorder %s155, %s169
    %p171 = scmp.eq.s32.totalorder %s19, 0
    %p172 = por %p170, %p171
    %s173 = ssub.s32 %s13, %s20
    %p174 = scmp.eq.s32.totalorder %s173, 0
    %s176 = sadd.s32 %s175, 1
    %s177 = scalar_select %p174, %s175, %s176
    %p180 = pneg %p174
    %p181 = scmp.eq.s32.totalorder %s13, 1
    %p182 = por %p180, %p181
    %p183 = scmp.ne.s32.totalorder %s175, %s178
    %p184 = scmp.eq.s32.totalorder %s13, 0
    %p185 = por %p183, %p184
    %p186 = scmp.ne.s32.totalorder %s175, %s178
    %p187 = scmp.eq.s32.totalorder %s18, 1
    %p188 = por %p186, %p187
    %p189 = scmp.ne.s32.totalorder %s178, %s179
    %p190 = scmp.eq.s32.totalorder %s18, 0
    %p191 = por %p189, %p190
    %p192 = scmp.ne.s32.totalorder %s178, %s179
    %p193 = scmp.eq.s32.totalorder %s19, 1
    %p194 = por %p192, %p193
    %p196 = scmp.ne.s32.totalorder %s179, %s195
    %p197 = scmp.eq.s32.totalorder %s19, 0
    %p198 = por %p196, %p197
    %p199 = scmp.le.s32.totalorder 1, %s13
    %p200 = scmp.lt.s32.totalorder %s13, 3
    %p201 = pnand %p199, %p200
    %p202 = pneg %p201
    // Predicated region
    $region9: #{gnet_forward.1} parent=5 // pred_check
      _
    $region10: #{gnet_forward.1} parent=5 // pred_check_branch
      %204 = sbr.rel (%p201) target = $region12
    $region11: #{gnet_forward.1} parent=5 // pred_region
      %s205 = ssub.s32 %s13, 1
      // Predicated region
      $region13: #{gnet_forward.1} parent=11 // pred_check
        %p206 = pneg %p60
      $region14: #{gnet_forward.1} parent=11 // pred_check_branch
        %208 = sbr.rel (%p206) target = $region16
      $region15: #{gnet_forward.1} parent=11 // pred_region
        _
      $region16: #{gnet_forward.1} parent=11 // pred_fallthru
        _
      // Predicated region
      $region17: #{gnet_forward.1} parent=11 // pred_check
        %p209 = pneg %p81
      $region18: #{gnet_forward.1} parent=11 // pred_check_branch
        %211 = sbr.rel (%p209) target = $region20
      $region19: #{gnet_forward.1} parent=11 // pred_region
        _
      $region20: #{gnet_forward.1} parent=11 // pred_fallthru
        _
      // Predicated region
      $region21: #{gnet_forward.1} parent=11 // pred_check
        %p212 = pneg %p102
      $region22: #{gnet_forward.1} parent=11 // pred_check_branch
        %214 = sbr.rel (%p212) target = $region24
      $region23: #{gnet_forward.1} parent=11 // pred_region
        _
      $region24: #{gnet_forward.1} parent=11 // pred_fallthru
        _
      // Predicated region
      $region25: #{gnet_forward.1} parent=11 // pred_check
        %p215 = pneg %p123
      $region26: #{gnet_forward.1} parent=11 // pred_check_branch
        %217 = sbr.rel (%p215) target = $region28
      $region27: #{gnet_forward.1} parent=11 // pred_region
        _
      $region28: #{gnet_forward.1} parent=11 // pred_fallthru
        _
      // Predicated region
      $region29: #{gnet_forward.1} parent=11 // pred_check
        %p218 = pneg %p144
      $region30: #{gnet_forward.1} parent=11 // pred_check_branch
        %220 = sbr.rel (%p218) target = $region32
      $region31: #{gnet_forward.1} parent=11 // pred_region
        _
      $region32: #{gnet_forward.1} parent=11 // pred_fallthru
        _
      // Predicated region
      $region33: #{gnet_forward.1} parent=11 // pred_check
        %p221 = pneg %p165
      $region34: #{gnet_forward.1} parent=11 // pred_check_branch
        %223 = sbr.rel (%p221) target = $region36
      $region35: #{gnet_forward.1} parent=11 // pred_region
        _
      $region36: #{gnet_forward.1} parent=11 // pred_fallthru
        _
    $region12: #{gnet_forward.1} parent=5 // pred_fallthru
      _
    %p224 = scmp.lt.s32.totalorder %s13, 2
    // Predicated region
    $region37: #{gnet_forward.1} parent=5 // pred_check
      %p225 = pneg %p224
    $region38: #{gnet_forward.1} parent=5 // pred_check_branch
      %227 = sbr.rel (%p225) target = $region40
    $region39: #{gnet_forward.1} parent=5 // pred_region
      // Predicated region
      $region41: #{gnet_forward.1} parent=39 // pred_check
        %p228 = pneg %p33
      $region42: #{gnet_forward.1} parent=39 // pred_check_branch
        %230 = sbr.rel (%p228) target = $region44
      $region43: #{gnet_forward.1} parent=39 // pred_region
        %s231 = smul.u32 16, %s13
        %p232 = scmp.lt.s32.totalorder %s231, 31
        %s233 = scalar_select %p232, %s231, 31
        %s234 = smul.addr %s233, 4
        %s235 = scalar_lea.vmem %s0, %s234
        %s236 = smul.u32 16, %s13
      $region44: #{gnet_forward.1} parent=39 // pred_fallthru
        _
    $region40: #{gnet_forward.1} parent=5 // pred_fallthru
      _
    %p237 = scmp.le.s32.totalorder 1, %s13
    %p238 = scmp.lt.s32.totalorder %s13, 3
    %p239 = pnand %p237, %p238
    %p240 = pneg %p239
    // Predicated region
    $region45: #{gnet_forward.1} parent=5 // pred_check
      _
    $region46: #{gnet_forward.1} parent=5 // pred_check_branch
      %242 = sbr.rel (%p239) target = $region48
    $region47: #{gnet_forward.1} parent=5 // pred_region
      %s243 = ssub.s32 %s13, 1
      %s244 = smul.u32 16, %s18
      %p245 = scmp.lt.s32.totalorder %s244, 31
      %s246 = scalar_select %p245, %s244, 31
      %s247 = smul.addr %s246, 4
      %s248 = scalar_lea.vmem %s0, %s247
      %p249 = pneg %p39
      %p250 = pneg %p36
      %p251 = pneg %p60
      %p252 = pneg %p57
      %p253 = pneg %p81
      %p254 = pneg %p78
      %p255 = pneg %p102
      %p256 = pneg %p99
      %p257 = pneg %p123
      %p258 = pneg %p120
      %p259 = pneg %p144
      %p260 = pneg %p141
      %p261 = pneg %p165
      %p262 = pneg %p162
      %p263 = pneg %p191
      %p264 = pneg %p188
      %s265 = smul.u32 16, %s18
      %p266 = scmp.lt.s32.totalorder %s265, 31
      %s267 = scalar_select %p266, %s265, 31
      %s268 = smul.addr %s267, 8
      %s269 = scalar_lea.vmem %s7, %s268
      %s270 = smul.u32 16, %s18
      %p271 = scmp.lt.s32.totalorder %s270, 31
      %s272 = scalar_select %p271, %s270, 31
      %s273 = smul.addr %s272, 4
      %s274 = scalar_lea.vmem %s0, %s273
      %s275 = smul.u32 16, %s18
      %s276 = smul.u32 16, %s18
      %p277 = scmp.lt.s32.totalorder %s276, 31
      %s278 = scalar_select %p277, %s276, 31
      %s279 = smul.addr %s278, 8
      %s280 = scalar_lea.vmem %s7, %s279
      %s281 = smul.u32 16, %s18
      %v283 = vld [vmem:[%s274] sm:$0xf]
      %v284 = vld [vmem:[%s274 + $0x4] sm:$0xf]
      %v285 = vld [vmem:[%s274 + $0x8] sm:$0xf]
      %v286 = vld [vmem:[%s274 + $0xc] sm:$0xf]
      %v287 = vld [vmem:[%s274 + $0x10] sm:$0xf]
      %v288 = vld [vmem:[%s274 + $0x14] sm:$0xf]
      %v289 = vld [vmem:[%s274 + $0x18] sm:$0xf]
      %v290 = vld [vmem:[%s274 + $0x1c] sm:$0xf]
      %v291 = vld [vmem:[%s274 + $0x20] sm:$0xf]
      %v292 = vld [vmem:[%s274 + $0x24] sm:$0xf]
      %v293 = vld [vmem:[%s274 + $0x28] sm:$0xf]
      %v294 = vld [vmem:[%s274 + $0x2c] sm:$0xf]
      %v295 = vld [vmem:[%s274 + $0x30] sm:$0xf]
      %v296 = vld [vmem:[%s274 + $0x34] sm:$0xf]
      %v297 = vld [vmem:[%s274 + $0x38] sm:$0xf]
      %v298 = vld [vmem:[%s274 + $0x3c] sm:$0xf]
      %v299 = vld [vmem:[%s1] sm:$0xf]
      %v300 = vld [vmem:[%s1 + $0x4] sm:$0xf]
      %v301 = vld [vmem:[%s1 + $0x8] sm:$0xf]
      %v302 = vld [vmem:[%s1 + $0xc] sm:$0xf]
      %v303 = vld [vmem:[%s2] sm:$0x1]
      %v305 = vperm.slane %v303, 0
      %v323 = vunpack.c.l.b16 %v283
      %v324 = vunpack.c.l.b16 %v284
      %v325 = vunpack.c.l.b16 %v285
      %v326 = vunpack.c.l.b16 %v286
      %v327 = vunpack.c.l.b16 %v287
      %v328 = vunpack.c.l.b16 %v288
      %v329 = vunpack.c.l.b16 %v289
      %v330 = vunpack.c.l.b16 %v290
      %v331 = vunpack.c.l.b16 %v291
      %v332 = vunpack.c.l.b16 %v292
      %v333 = vunpack.c.l.b16 %v293
      %v334 = vunpack.c.l.b16 %v294
      %v335 = vunpack.c.l.b16 %v295
      %v336 = vunpack.c.l.b16 %v296
      %v337 = vunpack.c.l.b16 %v297
      %v338 = vunpack.c.l.b16 %v298
      %v339 = vpack.c.b16 %v324, %v323
      %v340 = vpack.c.b16 %v326, %v325
      %v341 = vpack.c.b16 %v328, %v327
      %v342 = vpack.c.b16 %v330, %v329
      %v343 = vpack.c.b16 %v332, %v331
      %v344 = vpack.c.b16 %v334, %v333
      %v345 = vpack.c.b16 %v336, %v335
      %v346 = vpack.c.b16 %v338, %v337
      %v351 = vunpack.c.l.b16 %v299
      %v352 = vunpack.c.l.b16 %v300
      %v353 = vunpack.c.l.b16 %v301
      %v354 = vunpack.c.l.b16 %v302
      %v355 = vpack.c.b16 %v352, %v351
      %v356 = vpack.c.b16 %v354, %v353
      %vm359 = vcmask 261120
      %v361 = vsel %vm359, %v339, 0
      %v364 = vsel %vm359, %v340, 0
      %v367 = vsel %vm359, %v341, 0
      %v370 = vsel %vm359, %v342, 0
      %v373 = vsel %vm359, %v343, 0
      %v376 = vsel %vm359, %v344, 0
      %v379 = vsel %vm359, %v345, 0
      %v382 = vsel %vm359, %v346, 0
      %384 = vmatpush.bf16.msra.mxu0 0
      %385 = vmatpush.bf16.msra.mxu0 0
      %386 = vmatpush.bf16.msra.mxu0 0
      %387 = vmatpush.bf16.msra.mxu0 0
      %388 = vmatpush.bf16.msra.mxu0 0
      %389 = vmatpush.bf16.msra.mxu0 0
      %390 = vmatpush.bf16.msra.mxu0 %v356
      %391 = vmatpush.bf16.msra.mxu0 %v355
      %392 = vmatmul.bf16.gmra.mxu0 %v361
      %v393 = vpop.f32.mrf.mxu0
      %v394 = vadd.f32 %v305, %v393
      %v395 = vpop.f32.mrf.mxu0
      %v396 = vadd.f32 %v305, %v395
      %397 = vmatmul.bf16.gmra.mxu0 %v364
      %v398 = vpop.f32.mrf.mxu0
      %v399 = vadd.f32 %v305, %v398
      %v400 = vpop.f32.mrf.mxu0
      %v401 = vadd.f32 %v305, %v400
      %402 = vmatmul.bf16.gmra.mxu0 %v367
      %v403 = vpop.f32.mrf.mxu0
      %v404 = vadd.f32 %v305, %v403
      %v405 = vpop.f32.mrf.mxu0
      %v406 = vadd.f32 %v305, %v405
      %407 = vmatmul.bf16.gmra.mxu0 %v370
      %v408 = vpop.f32.mrf.mxu0
      %v409 = vadd.f32 %v305, %v408
      %v410 = vpop.f32.mrf.mxu0
      %v411 = vadd.f32 %v305, %v410
      %412 = vmatmul.bf16.gmra.mxu0 %v373
      %v413 = vpop.f32.mrf.mxu0
      %v414 = vadd.f32 %v305, %v413
      %v415 = vpop.f32.mrf.mxu0
      %v416 = vadd.f32 %v305, %v415
      %417 = vmatmul.bf16.gmra.mxu0 %v376
      %v418 = vpop.f32.mrf.mxu0
      %v419 = vadd.f32 %v305, %v418
      %v420 = vpop.f32.mrf.mxu0
      %v421 = vadd.f32 %v305, %v420
      %422 = vmatmul.bf16.gmra.mxu0 %v379
      %v423 = vpop.f32.mrf.mxu0
      %v424 = vadd.f32 %v305, %v423
      %v425 = vpop.f32.mrf.mxu0
      %v426 = vadd.f32 %v305, %v425
      %427 = vmatmul.bf16.gmra.mxu0 %v382
      %v428 = vpop.f32.mrf.mxu0
      %v429 = vadd.f32 %v305, %v428
      %v430 = vpop.f32.mrf.mxu0
      %v431 = vadd.f32 %v305, %v430
      %432 = vdwg.mxu0
      %v433 = vmax.f32 %v394, 0.0
      %v434 = vmax.f32 %v396, 0.0
      %v435 = vmax.f32 %v399, 0.0
      %v436 = vmax.f32 %v401, 0.0
      %v437 = vmax.f32 %v404, 0.0
      %v438 = vmax.f32 %v406, 0.0
      %v439 = vmax.f32 %v409, 0.0
      %v440 = vmax.f32 %v411, 0.0
      %v441 = vmax.f32 %v414, 0.0
      %v442 = vmax.f32 %v416, 0.0
      %v443 = vmax.f32 %v419, 0.0
      %v444 = vmax.f32 %v421, 0.0
      %v445 = vmax.f32 %v424, 0.0
      %v446 = vmax.f32 %v426, 0.0
      %v447 = vmax.f32 %v429, 0.0
      %v448 = vmax.f32 %v431, 0.0
      %v449 = vpack.c.bf16 %v434, %v433
      %v450 = vpack.c.bf16 %v436, %v435
      %v451 = vpack.c.bf16 %v438, %v437
      %v452 = vpack.c.bf16 %v440, %v439
      %v453 = vpack.c.bf16 %v442, %v441
      %v454 = vpack.c.bf16 %v444, %v443
      %v455 = vpack.c.bf16 %v446, %v445
      %v456 = vpack.c.bf16 %v448, %v447
      %v457 = vld [vmem:[%s3] sm:$0xf]
      %v458 = vld [vmem:[%s3 + $0x4] sm:$0xf]
      %v459 = vld [vmem:[%s3 + $0x8] sm:$0xf]
      %v460 = vld [vmem:[%s3 + $0xc] sm:$0xf]
      %v461 = vld [vmem:[%s4] sm:$0x1]
      %v463 = vperm.slane %v461, 0
      %v469 = vunpack.c.l.b16 %v457
      %v470 = vunpack.c.l.b16 %v458
      %v471 = vunpack.c.l.b16 %v459
      %v472 = vunpack.c.l.b16 %v460
      %v473 = vpack.c.b16 %v470, %v469
      %v474 = vpack.c.b16 %v472, %v471
      %v478 = vsel %vm359, %v449, 0
      %v481 = vsel %vm359, %v450, 0
      %v484 = vsel %vm359, %v451, 0
      %v487 = vsel %vm359, %v452, 0
      %v490 = vsel %vm359, %v453, 0
      %v493 = vsel %vm359, %v454, 0
      %v496 = vsel %vm359, %v455, 0
      %v499 = vsel %vm359, %v456, 0
      %501 = vmatpush.bf16.msra.mxu0 0
      %502 = vmatpush.bf16.msra.mxu0 0
      %503 = vmatpush.bf16.msra.mxu0 0
      %504 = vmatpush.bf16.msra.mxu0 0
      %505 = vmatpush.bf16.msra.mxu0 0
      %506 = vmatpush.bf16.msra.mxu0 0
      %507 = vmatpush.bf16.msra.mxu0 %v474
      %508 = vmatpush.bf16.msra.mxu0 %v473
      %509 = vmatmul.bf16.gmra.mxu0 %v478
      %v510 = vpop.f32.mrf.mxu0
      %v511 = vadd.f32 %v463, %v510
      %v512 = vpop.f32.mrf.mxu0
      %v513 = vadd.f32 %v463, %v512
      %514 = vmatmul.bf16.gmra.mxu0 %v481
      %v515 = vpop.f32.mrf.mxu0
      %v516 = vadd.f32 %v463, %v515
      %v517 = vpop.f32.mrf.mxu0
      %v518 = vadd.f32 %v463, %v517
      %519 = vmatmul.bf16.gmra.mxu0 %v484
      %v520 = vpop.f32.mrf.mxu0
      %v521 = vadd.f32 %v463, %v520
      %v522 = vpop.f32.mrf.mxu0
      %v523 = vadd.f32 %v463, %v522
      %524 = vmatmul.bf16.gmra.mxu0 %v487
      %v525 = vpop.f32.mrf.mxu0
      %v526 = vadd.f32 %v463, %v525
      %v527 = vpop.f32.mrf.mxu0
      %v528 = vadd.f32 %v463, %v527
      %529 = vmatmul.bf16.gmra.mxu0 %v490
      %v530 = vpop.f32.mrf.mxu0
      %v531 = vadd.f32 %v463, %v530
      %v532 = vpop.f32.mrf.mxu0
      %v533 = vadd.f32 %v463, %v532
      %534 = vmatmul.bf16.gmra.mxu0 %v493
      %v535 = vpop.f32.mrf.mxu0
      %v536 = vadd.f32 %v463, %v535
      %v537 = vpop.f32.mrf.mxu0
      %v538 = vadd.f32 %v463, %v537
      %539 = vmatmul.bf16.gmra.mxu0 %v496
      %v540 = vpop.f32.mrf.mxu0
      %v541 = vadd.f32 %v463, %v540
      %v542 = vpop.f32.mrf.mxu0
      %v543 = vadd.f32 %v463, %v542
      %544 = vmatmul.bf16.gmra.mxu0 %v499
      %v545 = vpop.f32.mrf.mxu0
      %v546 = vadd.f32 %v463, %v545
      %v547 = vpop.f32.mrf.mxu0
      %v548 = vadd.f32 %v463, %v547
      %549 = vdwg.mxu0
      %v550 = vmax.f32 %v511, 0.0
      %v551 = vmax.f32 %v513, 0.0
      %v552 = vmax.f32 %v516, 0.0
      %v553 = vmax.f32 %v518, 0.0
      %v554 = vmax.f32 %v521, 0.0
      %v555 = vmax.f32 %v523, 0.0
      %v556 = vmax.f32 %v526, 0.0
      %v557 = vmax.f32 %v528, 0.0
      %v558 = vmax.f32 %v531, 0.0
      %v559 = vmax.f32 %v533, 0.0
      %v560 = vmax.f32 %v536, 0.0
      %v561 = vmax.f32 %v538, 0.0
      %v562 = vmax.f32 %v541, 0.0
      %v563 = vmax.f32 %v543, 0.0
      %v564 = vmax.f32 %v546, 0.0
      %v565 = vmax.f32 %v548, 0.0
      %v566 = vpack.c.bf16 %v551, %v550
      %v567 = vpack.c.bf16 %v553, %v552
      %v568 = vpack.c.bf16 %v555, %v554
      %v569 = vpack.c.bf16 %v557, %v556
      %v570 = vpack.c.bf16 %v559, %v558
      %v571 = vpack.c.bf16 %v561, %v560
      %v572 = vpack.c.bf16 %v563, %v562
      %v573 = vpack.c.bf16 %v565, %v564
      %v574 = vld [vmem:[%s5] sm:$0xf]
      %v575 = vld [vmem:[%s5 + $0x4] sm:$0xf]
      %v576 = vld [vmem:[%s5 + $0x8] sm:$0xf]
      %v577 = vld [vmem:[%s5 + $0xc] sm:$0xf]
      %v578 = vld [vmem:[%s6] sm:$0x1]
      %v580 = vperm.slane %v578, 0
      %v586 = vunpack.c.l.b16 %v574
      %v587 = vunpack.c.l.b16 %v575
      %v588 = vunpack.c.l.b16 %v576
      %v589 = vunpack.c.l.b16 %v577
      %v590 = vpack.c.b16 %v587, %v586
      %v591 = vpack.c.b16 %v589, %v588
      %v595 = vsel %vm359, %v566, 0
      %v598 = vsel %vm359, %v567, 0
      %v601 = vsel %vm359, %v568, 0
      %v604 = vsel %vm359, %v569, 0
      %v607 = vsel %vm359, %v570, 0
      %v610 = vsel %vm359, %v571, 0
      %v613 = vsel %vm359, %v572, 0
      %v616 = vsel %vm359, %v573, 0
      %618 = vmatpush.bf16.msra.mxu0 0
      %619 = vmatpush.bf16.msra.mxu0 0
      %620 = vmatpush.bf16.msra.mxu0 0
      %621 = vmatpush.bf16.msra.mxu0 0
      %622 = vmatpush.bf16.msra.mxu0 0
      %623 = vmatpush.bf16.msra.mxu0 0
      %624 = vmatpush.bf16.msra.mxu0 %v591
      %625 = vmatpush.bf16.msra.mxu0 %v590
      %626 = vmatmul.bf16.gmra.mxu0 %v595
      %v627 = vpop.f32.mrf.mxu0
      %v628 = vadd.f32 %v580, %v627
      %v629 = vpop.f32.mrf.mxu0
      %v630 = vadd.f32 %v580, %v629
      %631 = vmatmul.bf16.gmra.mxu0 %v598
      %v632 = vpop.f32.mrf.mxu0
      %v633 = vadd.f32 %v580, %v632
      %v634 = vpop.f32.mrf.mxu0
      %v635 = vadd.f32 %v580, %v634
      %636 = vmatmul.bf16.gmra.mxu0 %v601
      %v637 = vpop.f32.mrf.mxu0
      %v638 = vadd.f32 %v580, %v637
      %v639 = vpop.f32.mrf.mxu0
      %v640 = vadd.f32 %v580, %v639
      %641 = vmatmul.bf16.gmra.mxu0 %v604
      %v642 = vpop.f32.mrf.mxu0
      %v643 = vadd.f32 %v580, %v642
      %v644 = vpop.f32.mrf.mxu0
      %v645 = vadd.f32 %v580, %v644
      %646 = vmatmul.bf16.gmra.mxu0 %v607
      %v647 = vpop.f32.mrf.mxu0
      %v648 = vadd.f32 %v580, %v647
      %v649 = vpop.f32.mrf.mxu0
      %v650 = vadd.f32 %v580, %v649
      %651 = vmatmul.bf16.gmra.mxu0 %v610
      %v652 = vpop.f32.mrf.mxu0
      %v653 = vadd.f32 %v580, %v652
      %v654 = vpop.f32.mrf.mxu0
      %v655 = vadd.f32 %v580, %v654
      %656 = vmatmul.bf16.gmra.mxu0 %v613
      %v657 = vpop.f32.mrf.mxu0
      %v658 = vadd.f32 %v580, %v657
      %v659 = vpop.f32.mrf.mxu0
      %v660 = vadd.f32 %v580, %v659
      %661 = vmatmul.bf16.gmra.mxu0 %v616
      %v662 = vpop.f32.mrf.mxu0
      %v663 = vadd.f32 %v580, %v662
      %v664 = vpop.f32.mrf.mxu0
      %v665 = vadd.f32 %v580, %v664
      %666 = vdwg.mxu0
      %v667 = vmax.f32 %v628, 0.0
      %v668 = vmax.f32 %v630, 0.0
      %v669 = vmax.f32 %v633, 0.0
      %v670 = vmax.f32 %v635, 0.0
      %v671 = vmax.f32 %v638, 0.0
      %v672 = vmax.f32 %v640, 0.0
      %v673 = vmax.f32 %v643, 0.0
      %v674 = vmax.f32 %v645, 0.0
      %v675 = vmax.f32 %v648, 0.0
      %v676 = vmax.f32 %v650, 0.0
      %v677 = vmax.f32 %v653, 0.0
      %v678 = vmax.f32 %v655, 0.0
      %v679 = vmax.f32 %v658, 0.0
      %v680 = vmax.f32 %v660, 0.0
      %v681 = vmax.f32 %v663, 0.0
      %v682 = vmax.f32 %v665, 0.0
      %vm683 = vcmask 130048
      %684 = vst.msk [vmem:[%s280] sm:$0xff] %vm683, %v667
      %685 = vst.msk [vmem:[%s280 + $0x8] sm:$0xff] %vm683, %v668
      %686 = vst.msk [vmem:[%s280 + $0x10] sm:$0xff] %vm683, %v669
      %687 = vst.msk [vmem:[%s280 + $0x18] sm:$0xff] %vm683, %v670
      %688 = vst.msk [vmem:[%s280 + $0x20] sm:$0xff] %vm683, %v671
      %689 = vst.msk [vmem:[%s280 + $0x28] sm:$0xff] %vm683, %v672
      %690 = vst.msk [vmem:[%s280 + $0x30] sm:$0xff] %vm683, %v673
      %691 = vst.msk [vmem:[%s280 + $0x38] sm:$0xff] %vm683, %v674
      %692 = vst.msk [vmem:[%s280 + $0x40] sm:$0xff] %vm683, %v675
      %693 = vst.msk [vmem:[%s280 + $0x48] sm:$0xff] %vm683, %v676
      %694 = vst.msk [vmem:[%s280 + $0x50] sm:$0xff] %vm683, %v677
      %695 = vst.msk [vmem:[%s280 + $0x58] sm:$0xff] %vm683, %v678
      %696 = vst.msk [vmem:[%s280 + $0x60] sm:$0xff] %vm683, %v679
      %697 = vst.msk [vmem:[%s280 + $0x68] sm:$0xff] %vm683, %v680
      %698 = vst.msk [vmem:[%s280 + $0x70] sm:$0xff] %vm683, %v681
      %699 = vst.msk [vmem:[%s280 + $0x78] sm:$0xff] %vm683, %v682
      %s700 = smul.u32 16, %s18
      %p701 = scmp.lt.s32.totalorder %s700, 31
      %s702 = scalar_select %p701, %s700, 31
      %s703 = smul.addr %s702, 8
      %s704 = scalar_lea.vmem %s7, %s703
      // Predicated region
      $region49: #{gnet_forward.1} parent=47 // pred_check
        %p705 = pneg %p188
      $region50: #{gnet_forward.1} parent=47 // pred_check_branch
        %707 = sbr.rel (%p705) target = $region52
      $region51: #{gnet_forward.1} parent=47 // pred_region
        %s708 = smul.u32 16, %s18
      $region52: #{gnet_forward.1} parent=47 // pred_fallthru
        _
    $region48: #{gnet_forward.1} parent=5 // pred_fallthru
      _
    %p709 = scmp.le.s32.totalorder 2, %s13
    // Predicated region
    $region53: #{gnet_forward.1} parent=5 // pred_check
      %p710 = pneg %p709
    $region54: #{gnet_forward.1} parent=5 // pred_check_branch
      %712 = sbr.rel (%p710) target = $region56
    $region55: #{gnet_forward.1} parent=5 // pred_region
      %s713 = ssub.s32 %s13, 2
      // Predicated region
      $region57: #{gnet_forward.1} parent=55 // pred_check
        %p714 = pneg %p194
      $region58: #{gnet_forward.1} parent=55 // pred_check_branch
        %716 = sbr.rel (%p714) target = $region60
      $region59: #{gnet_forward.1} parent=55 // pred_region
        %s717 = smul.u32 16, %s19
        %p718 = scmp.lt.s32.totalorder %s717, 31
        %s719 = scalar_select %p718, %s717, 31
        %s720 = smul.addr %s719, 8
        %s721 = scalar_lea.vmem %s7, %s720
      $region60: #{gnet_forward.1} parent=55 // pred_fallthru
        _
    $region56: #{gnet_forward.1} parent=5 // pred_fallthru
      _
  $region6: #{gnet_forward.1} parent=0 // loop_footer
    %s17 = sadd.s32 1, %s13
  $region7: #{gnet_forward.1} parent=0 // loop_footer_branch
    %12 = sbr.rel target = $region3
  $region8: #{gnet_forward.1} parent=0 // loop_exit
    _

</llo_original>
